<compile_context>
chip_gen: v6e
topology: v6e:2x2x1
jax: 0.10.0
libtpu: 0.0.40
codegen_flags: <defaults>
</compile_context>

<pallas_src>
import jax
import jax.numpy as jnp
from jax.experimental import pallas as pl
from jax.experimental.pallas import tpu as pltpu


def _round_up(x, m):
    return ((x + m - 1) // m) * m


def _choose_tile_rows(C, n_rows, itemsize, target_bytes=4 << 20):
    """Number of 128-lane rows per spatial tile.

    Sized so each grid step streams ~target_bytes of modality input
    (3 * C * rows * 128 * itemsize).  Rounded to a multiple of 32 rows so the f32 inputs
    ((8,128) tiles) and the int8 pseudo-label output ((32,128) tiles) stay layout-aligned.
    If the whole padded spatial extent fits in one tile, take it (fewest grid steps)."""
    bytes_per_row = 3 * C * 128 * itemsize
    max_rows = max(32, (target_bytes // bytes_per_row) // 32 * 32)
    if n_rows <= max_rows:
        return _round_up(n_rows, 32)
    k = -(-n_rows // max_rows)            # number of spatial tiles
    return _round_up(-(-n_rows // k), 32)


def _consistency_kernel(m1_ref, m2_ref, m3_ref, partials_ref, pseudo_ref):
    # m{1,2,3}_ref : VMEM (1, C, TS, 128)   one batch, one spatial tile, all channels
    # partials_ref : VMEM (1, 1, 3, 128)    sublane-reduced SSE partials (pairs 12, 23, 31)
    # pseudo_ref   : VMEM (1, TS, 128)      pseudo labels for this tile (int8 or int32)
    C = m1_ref.shape[1]

    def chan(ref, ch):
        return ref[0, ch].astype(jnp.float32)          # (TS, 128) full-sublane slab

    v1 = chan(m1_ref, 0)
    v2 = chan(m2_ref, 0)
    v3 = chan(m3_ref, 0)

    d12 = v1 - v2
    d23 = v2 - v3
    d31 = v3 - v1
    s12 = d12 * d12
    s23 = d23 * d23
    s31 = d31 * d31

    bv1, bv2, bv3 = v1, v2, v3
    zero_idx = jnp.zeros(v1.shape, jnp.int32)
    bi1 = zero_idx
    bi2 = zero_idx
    bi3 = zero_idx

    # Fused per-channel pass: pairwise squared-diff accumulation + three channel-argmax
    # scans share each freshly loaded (TS, 128) slab, keeping only ~a dozen vregs of
    # accumulators live regardless of C.  C (class dim) is small -> static unroll.
    # TODO(synk): for very large C switch to lax.fori_loop(..., unroll=True).
    for ch in range(1, C):
        v1 = chan(m1_ref, ch)
        v2 = chan(m2_ref, ch)
        v3 = chan(m3_ref, ch)

        d12 = v1 - v2
        d23 = v2 - v3
        d31 = v3 - v1
        s12 = s12 + d12 * d12
        s23 = s23 + d23 * d23
        s31 = s31 + d31 * d31

        u1 = v1 > bv1            # strict '>' keeps the first max, matching torch.argmax
        u2 = v2 > bv2
        u3 = v3 > bv3
        bv1 = jnp.where(u1, v1, bv1)
        bv2 = jnp.where(u2, v2, bv2)
        bv3 = jnp.where(u3, v3, bv3)
        bi1 = jnp.where(u1, ch, bi1)
        bi2 = jnp.where(u2, ch, bi2)
        bi3 = jnp.where(u3, ch, bi3)

    # Per-tile SSE partials, reduced over sublanes only (cheap XLU reduce) -> (3, 128).
    # Cross-lane / cross-tile reduction and alpha/beta/gamma weighting happen in the wrapper.
    partials_ref[0, 0] = jnp.concatenate(
        [jnp.sum(s12, axis=0, keepdims=True),
         jnp.sum(s23, axis=0, keepdims=True),
         jnp.sum(s31, axis=0, keepdims=True)], axis=0)

    # Pseudo labels: sublane-dense (TS, 128) store.
    pseudo = jnp.where(bi1 == bi2, bi1, bi2)
    pseudo = jnp.where(pseudo == bi3, pseudo, 0)
    pseudo_ref[0] = pseudo.astype(pseudo_ref.dtype)


def adaptive_multimodal_consistency_loss(modality1, modality2, modality3,
                                         alpha=1.0, beta=1.0, gamma=1.0):
    """modality{1,2,3}: (B, C, H, W). Returns (scalar f32 loss, (B, H, W) int32 pseudo labels).

    Note: pseudo labels are int32 (torch.argmax would give int64)."""
    B, C, H, W = modality1.shape
    HW = H * W

    # Lane-dense layout: flatten spatial into 128-lane rows, pad rows up to the tile size.
    n_rows = pl.cdiv(HW, 128)
    ts = _choose_tile_rows(C, n_rows, modality1.dtype.itemsize)
    rows_pad = _round_up(n_rows, ts)
    num_tiles = rows_pad // ts
    hw_pad = rows_pad * 128

    def prep(m):
        m = m.reshape(B, C, HW)
        if hw_pad != HW:
            m = jnp.pad(m, ((0, 0), (0, 0), (0, hw_pad - HW)))
        return m.reshape(B, C, rows_pad, 128)

    m1, m2, m3 = prep(modality1), prep(modality2), prep(modality3)

    # int8 pseudo labels when class indices fit -> 4x less HBM write traffic.
    pseudo_dtype, pseudo_bytes = (jnp.int8, 1) if C <= 127 else (jnp.int32, 4)

    in_spec = pl.BlockSpec((1, C, ts, 128), lambda b, j: (b, 0, j, 0))

    # Double-buffered VMEM footprint (3 inputs + 2 outputs) with margin; raising the scoped
    # VMEM limit mostly matters on v5e (16 MiB default).  Stays well under physical VMEM.
    block_bytes = (3 * C * ts * 128 * modality1.dtype.itemsize
                   + ts * 128 * pseudo_bytes + 3 * 128 * 4)
    vmem_limit = int(min(max(4 * block_bytes, 32 << 20), 56 << 20))

    partials, pseudo_pad = pl.pallas_call(
        _consistency_kernel,
        grid=(B, num_tiles),
        in_specs=[in_spec, in_spec, in_spec],
        out_specs=(
            pl.BlockSpec((1, 1, 3, 128), lambda b, j: (b, j, 0, 0)),
            pl.BlockSpec((1, ts, 128), lambda b, j: (b, j, 0)),
        ),
        out_shape=(
            jax.ShapeDtypeStruct((B, num_tiles, 3, 128), jnp.float32),
            jax.ShapeDtypeStruct((B, rows_pad, 128), pseudo_dtype),
        ),
        compiler_params=pltpu.CompilerParams(
            dimension_semantics=("parallel", "parallel"),
            vmem_limit_bytes=vmem_limit),
    )(m1, m2, m3)

    # Finalize in the wrapper: exact element count, alpha/beta/gamma applied once.
    sums = jnp.sum(partials, axis=(0, 1, 3))            # (3,) per-pair SSE
    n_elems = float(B * C * H * W)
    loss = (alpha * sums[0] + beta * sums[1] + gamma * sums[2]) / n_elems

    pseudo = (pseudo_pad.reshape(B, hw_pad)[:, :HW]
              .reshape(B, H, W).astype(jnp.int32))
    return loss, pseudo


def _reference(m1, m2, m3, alpha=1.0, beta=1.0, gamma=1.0):
    mse = lambda a, b: jnp.mean((a - b) ** 2)
    loss = alpha * mse(m1, m2) + beta * mse(m2, m3) + gamma * mse(m3, m1)
    l1 = jnp.argmax(m1, axis=1).astype(jnp.int32)
    l2 = jnp.argmax(m2, axis=1).astype(jnp.int32)
    l3 = jnp.argmax(m3, axis=1).astype(jnp.int32)
    pseudo = jnp.where(l1 == l2, l1, l2)
    pseudo = jnp.where(pseudo == l3, pseudo, jnp.zeros_like(pseudo))
    return loss, pseudo


if __name__ == "__main__":
    key = jax.random.PRNGKey(0)

    # Module __init__: alpha = beta = gamma = 1.0 (learnable scalars, applied in wrapper).
    alpha, beta, gamma = 1.0, 1.0, 1.0

    ok = True
    for (B, C, H, W) in [(2, 4, 16, 16), (1, 3, 7, 9)]:
        k1, k2, k3, key = jax.random.split(key, 4)
        m1 = jax.random.normal(k1, (B, C, H, W), dtype=jnp.float32)
        m2 = jax.random.normal(k2, (B, C, H, W), dtype=jnp.float32)
        m3 = jax.random.normal(k3, (B, C, H, W), dtype=jnp.float32)

        loss, pseudo = adaptive_multimodal_consistency_loss(m1, m2, m3, alpha, beta, gamma)
        jax.block_until_ready((loss, pseudo))

        ref_loss, ref_pseudo = _reference(m1, m2, m3, alpha, beta, gamma)
        assert jnp.allclose(loss, ref_loss, rtol=1e-5, atol=1e-6), (loss, ref_loss)
        assert jnp.array_equal(pseudo, ref_pseudo)

    if ok:
        print("KERNEL_OK")
</pallas_src>

<mosaic_0001>
module attributes {stable_mosaic.version = 11 : i64} {
  func.func @_consistency_kernel(%arg0: i32, %arg1: i32, %arg2: memref<1x4x32x128xf32, #tpu.memory_space<vmem>>, %arg3: memref<1x4x32x128xf32, #tpu.memory_space<vmem>>, %arg4: memref<1x4x32x128xf32, #tpu.memory_space<vmem>>, %arg5: memref<1x1x3x128xf32, #tpu.memory_space<vmem>>, %arg6: memref<1x32x128xi8, #tpu.memory_space<vmem>>) attributes {dimension_semantics = [#tpu.dimension_semantics<parallel>, #tpu.dimension_semantics<parallel>], iteration_bounds = array<i64: 2, 1>, scalar_prefetch = 0 : i64, scratch_operands = 0 : i64, tpu.core_type = #tpu.core_type<tc>, window_params = [{transform_indices = @transform_0, window_bounds = array<i64: 1, 4, 32, 128>}, {transform_indices = @transform_1, window_bounds = array<i64: 1, 4, 32, 128>}, {transform_indices = @transform_2, window_bounds = array<i64: 1, 4, 32, 128>}, {transform_indices = @transform_3, window_bounds = array<i64: 1, 1, 3, 128>}, {transform_indices = @transform_4, window_bounds = array<i64: 1, 32, 128>}]} {
    %c0 = arith.constant 0 : index
    %c0_0 = arith.constant 0 : index
    %c0_1 = arith.constant 0 : index
    %c0_2 = arith.constant 0 : index
    %0 = vector.load %arg2[%c0, %c0_0, %c0_1, %c0_2] : memref<1x4x32x128xf32, #tpu.memory_space<vmem>>, vector<1x1x32x128xf32>
    %1 = vector.shape_cast %0 : vector<1x1x32x128xf32> to vector<32x128xf32>
    %c0_3 = arith.constant 0 : index
    %c0_4 = arith.constant 0 : index
    %c0_5 = arith.constant 0 : index
    %c0_6 = arith.constant 0 : index
    %2 = vector.load %arg3[%c0_3, %c0_4, %c0_5, %c0_6] : memref<1x4x32x128xf32, #tpu.memory_space<vmem>>, vector<1x1x32x128xf32>
    %3 = vector.shape_cast %2 : vector<1x1x32x128xf32> to vector<32x128xf32>
    %c0_7 = arith.constant 0 : index
    %c0_8 = arith.constant 0 : index
    %c0_9 = arith.constant 0 : index
    %c0_10 = arith.constant 0 : index
    %4 = vector.load %arg4[%c0_7, %c0_8, %c0_9, %c0_10] : memref<1x4x32x128xf32, #tpu.memory_space<vmem>>, vector<1x1x32x128xf32>
    %5 = vector.shape_cast %4 : vector<1x1x32x128xf32> to vector<32x128xf32>
    %6 = arith.subf %1, %3 : vector<32x128xf32>
    %7 = arith.subf %3, %5 : vector<32x128xf32>
    %8 = arith.subf %5, %1 : vector<32x128xf32>
    %9 = arith.mulf %6, %6 : vector<32x128xf32>
    %10 = arith.mulf %7, %7 : vector<32x128xf32>
    %11 = arith.mulf %8, %8 : vector<32x128xf32>
    %c0_i32 = arith.constant 0 : i32
    %12 = vector.broadcast %c0_i32 : i32 to vector<32x128xi32>
    %c0_11 = arith.constant 0 : index
    %c1 = arith.constant 1 : index
    %c0_12 = arith.constant 0 : index
    %c0_13 = arith.constant 0 : index
    %13 = vector.load %arg2[%c0_11, %c1, %c0_12, %c0_13] : memref<1x4x32x128xf32, #tpu.memory_space<vmem>>, vector<1x1x32x128xf32>
    %14 = vector.shape_cast %13 : vector<1x1x32x128xf32> to vector<32x128xf32>
    %c0_14 = arith.constant 0 : index
    %c1_15 = arith.constant 1 : index
    %c0_16 = arith.constant 0 : index
    %c0_17 = arith.constant 0 : index
    %15 = vector.load %arg3[%c0_14, %c1_15, %c0_16, %c0_17] : memref<1x4x32x128xf32, #tpu.memory_space<vmem>>, vector<1x1x32x128xf32>
    %16 = vector.shape_cast %15 : vector<1x1x32x128xf32> to vector<32x128xf32>
    %c0_18 = arith.constant 0 : index
    %c1_19 = arith.constant 1 : index
    %c0_20 = arith.constant 0 : index
    %c0_21 = arith.constant 0 : index
    %17 = vector.load %arg4[%c0_18, %c1_19, %c0_20, %c0_21] : memref<1x4x32x128xf32, #tpu.memory_space<vmem>>, vector<1x1x32x128xf32>
    %18 = vector.shape_cast %17 : vector<1x1x32x128xf32> to vector<32x128xf32>
    %19 = arith.subf %14, %16 : vector<32x128xf32>
    %20 = arith.subf %16, %18 : vector<32x128xf32>
    %21 = arith.subf %18, %14 : vector<32x128xf32>
    %22 = arith.mulf %19, %19 : vector<32x128xf32>
    %23 = arith.addf %9, %22 : vector<32x128xf32>
    %24 = arith.mulf %20, %20 : vector<32x128xf32>
    %25 = arith.addf %10, %24 : vector<32x128xf32>
    %26 = arith.mulf %21, %21 : vector<32x128xf32>
    %27 = arith.addf %11, %26 : vector<32x128xf32>
    %28 = arith.cmpf ogt, %14, %1 : vector<32x128xf32>
    %29 = arith.cmpf ogt, %16, %3 : vector<32x128xf32>
    %30 = arith.cmpf ogt, %18, %5 : vector<32x128xf32>
    %31 = arith.select %28, %14, %1 : vector<32x128xi1>, vector<32x128xf32>
    %32 = arith.select %29, %16, %3 : vector<32x128xi1>, vector<32x128xf32>
    %33 = arith.select %30, %18, %5 : vector<32x128xi1>, vector<32x128xf32>
    %c1_i32 = arith.constant 1 : i32
    %34 = vector.broadcast %c1_i32 : i32 to vector<32x128xi32>
    %35 = arith.select %28, %34, %12 : vector<32x128xi1>, vector<32x128xi32>
    %c1_i32_22 = arith.constant 1 : i32
    %36 = vector.broadcast %c1_i32_22 : i32 to vector<32x128xi32>
    %37 = arith.select %29, %36, %12 : vector<32x128xi1>, vector<32x128xi32>
    %c1_i32_23 = arith.constant 1 : i32
    %38 = vector.broadcast %c1_i32_23 : i32 to vector<32x128xi32>
    %39 = arith.select %30, %38, %12 : vector<32x128xi1>, vector<32x128xi32>
    %c0_24 = arith.constant 0 : index
    %c2 = arith.constant 2 : index
    %c0_25 = arith.constant 0 : index
    %c0_26 = arith.constant 0 : index
    %40 = vector.load %arg2[%c0_24, %c2, %c0_25, %c0_26] : memref<1x4x32x128xf32, #tpu.memory_space<vmem>>, vector<1x1x32x128xf32>
    %41 = vector.shape_cast %40 : vector<1x1x32x128xf32> to vector<32x128xf32>
    %c0_27 = arith.constant 0 : index
    %c2_28 = arith.constant 2 : index
    %c0_29 = arith.constant 0 : index
    %c0_30 = arith.constant 0 : index
    %42 = vector.load %arg3[%c0_27, %c2_28, %c0_29, %c0_30] : memref<1x4x32x128xf32, #tpu.memory_space<vmem>>, vector<1x1x32x128xf32>
    %43 = vector.shape_cast %42 : vector<1x1x32x128xf32> to vector<32x128xf32>
    %c0_31 = arith.constant 0 : index
    %c2_32 = arith.constant 2 : index
    %c0_33 = arith.constant 0 : index
    %c0_34 = arith.constant 0 : index
    %44 = vector.load %arg4[%c0_31, %c2_32, %c0_33, %c0_34] : memref<1x4x32x128xf32, #tpu.memory_space<vmem>>, vector<1x1x32x128xf32>
    %45 = vector.shape_cast %44 : vector<1x1x32x128xf32> to vector<32x128xf32>
    %46 = arith.subf %41, %43 : vector<32x128xf32>
    %47 = arith.subf %43, %45 : vector<32x128xf32>
    %48 = arith.subf %45, %41 : vector<32x128xf32>
    %49 = arith.mulf %46, %46 : vector<32x128xf32>
    %50 = arith.addf %23, %49 : vector<32x128xf32>
    %51 = arith.mulf %47, %47 : vector<32x128xf32>
    %52 = arith.addf %25, %51 : vector<32x128xf32>
    %53 = arith.mulf %48, %48 : vector<32x128xf32>
    %54 = arith.addf %27, %53 : vector<32x128xf32>
    %55 = arith.cmpf ogt, %41, %31 : vector<32x128xf32>
    %56 = arith.cmpf ogt, %43, %32 : vector<32x128xf32>
    %57 = arith.cmpf ogt, %45, %33 : vector<32x128xf32>
    %58 = arith.select %55, %41, %31 : vector<32x128xi1>, vector<32x128xf32>
    %59 = arith.select %56, %43, %32 : vector<32x128xi1>, vector<32x128xf32>
    %60 = arith.select %57, %45, %33 : vector<32x128xi1>, vector<32x128xf32>
    %c2_i32 = arith.constant 2 : i32
    %61 = vector.broadcast %c2_i32 : i32 to vector<32x128xi32>
    %62 = arith.select %55, %61, %35 : vector<32x128xi1>, vector<32x128xi32>
    %c2_i32_35 = arith.constant 2 : i32
    %63 = vector.broadcast %c2_i32_35 : i32 to vector<32x128xi32>
    %64 = arith.select %56, %63, %37 : vector<32x128xi1>, vector<32x128xi32>
    %c2_i32_36 = arith.constant 2 : i32
    %65 = vector.broadcast %c2_i32_36 : i32 to vector<32x128xi32>
    %66 = arith.select %57, %65, %39 : vector<32x128xi1>, vector<32x128xi32>
    %c0_37 = arith.constant 0 : index
    %c3 = arith.constant 3 : index
    %c0_38 = arith.constant 0 : index
    %c0_39 = arith.constant 0 : index
    %67 = vector.load %arg2[%c0_37, %c3, %c0_38, %c0_39] : memref<1x4x32x128xf32, #tpu.memory_space<vmem>>, vector<1x1x32x128xf32>
    %68 = vector.shape_cast %67 : vector<1x1x32x128xf32> to vector<32x128xf32>
    %c0_40 = arith.constant 0 : index
    %c3_41 = arith.constant 3 : index
    %c0_42 = arith.constant 0 : index
    %c0_43 = arith.constant 0 : index
    %69 = vector.load %arg3[%c0_40, %c3_41, %c0_42, %c0_43] : memref<1x4x32x128xf32, #tpu.memory_space<vmem>>, vector<1x1x32x128xf32>
    %70 = vector.shape_cast %69 : vector<1x1x32x128xf32> to vector<32x128xf32>
    %c0_44 = arith.constant 0 : index
    %c3_45 = arith.constant 3 : index
    %c0_46 = arith.constant 0 : index
    %c0_47 = arith.constant 0 : index
    %71 = vector.load %arg4[%c0_44, %c3_45, %c0_46, %c0_47] : memref<1x4x32x128xf32, #tpu.memory_space<vmem>>, vector<1x1x32x128xf32>
    %72 = vector.shape_cast %71 : vector<1x1x32x128xf32> to vector<32x128xf32>
    %73 = arith.subf %68, %70 : vector<32x128xf32>
    %74 = arith.subf %70, %72 : vector<32x128xf32>
    %75 = arith.subf %72, %68 : vector<32x128xf32>
    %76 = arith.mulf %73, %73 : vector<32x128xf32>
    %77 = arith.addf %50, %76 : vector<32x128xf32>
    %78 = arith.mulf %74, %74 : vector<32x128xf32>
    %79 = arith.addf %52, %78 : vector<32x128xf32>
    %80 = arith.mulf %75, %75 : vector<32x128xf32>
    %81 = arith.addf %54, %80 : vector<32x128xf32>
    %82 = arith.cmpf ogt, %68, %58 : vector<32x128xf32>
    %83 = arith.cmpf ogt, %70, %59 : vector<32x128xf32>
    %84 = arith.cmpf ogt, %72, %60 : vector<32x128xf32>
    %c3_i32 = arith.constant 3 : i32
    %85 = vector.broadcast %c3_i32 : i32 to vector<32x128xi32>
    %86 = arith.select %82, %85, %62 : vector<32x128xi1>, vector<32x128xi32>
    %c3_i32_48 = arith.constant 3 : i32
    %87 = vector.broadcast %c3_i32_48 : i32 to vector<32x128xi32>
    %88 = arith.select %83, %87, %64 : vector<32x128xi1>, vector<32x128xi32>
    %c3_i32_49 = arith.constant 3 : i32
    %89 = vector.broadcast %c3_i32_49 : i32 to vector<32x128xi32>
    %90 = arith.select %84, %89, %66 : vector<32x128xi1>, vector<32x128xi32>
    %cst = arith.constant dense<0.000000e+00> : vector<128xf32>
    %91 = vector.multi_reduction <add>, %77, %cst [0] : vector<32x128xf32> to vector<128xf32>
    %92 = vector.shape_cast %91 : vector<128xf32> to vector<1x128xf32>
    %cst_50 = arith.constant dense<0.000000e+00> : vector<128xf32>
    %93 = vector.multi_reduction <add>, %79, %cst_50 [0] : vector<32x128xf32> to vector<128xf32>
    %94 = vector.shape_cast %93 : vector<128xf32> to vector<1x128xf32>
    %cst_51 = arith.constant dense<0.000000e+00> : vector<128xf32>
    %95 = vector.multi_reduction <add>, %81, %cst_51 [0] : vector<32x128xf32> to vector<128xf32>
    %96 = vector.shape_cast %95 : vector<128xf32> to vector<1x128xf32>
    %97 = tpu.concatenate %92, %94, %96 in 0 : vector<1x128xf32>, vector<1x128xf32>, vector<1x128xf32> -> vector<3x128xf32>
    %c0_52 = arith.constant 0 : index
    %c0_53 = arith.constant 0 : index
    %c0_54 = arith.constant 0 : index
    %c0_55 = arith.constant 0 : index
    %98 = vector.load %arg5[%c0_52, %c0_53, %c0_54, %c0_55] : memref<1x1x3x128xf32, #tpu.memory_space<vmem>>, vector<1x1x3x128xf32>
    %99 = vector.shape_cast %98 : vector<1x1x3x128xf32> to vector<3x128xf32>
    %100 = vector.shape_cast %97 : vector<3x128xf32> to vector<1x1x3x128xf32>
    tpu.vector_store %arg5[%c0_52, %c0_53, %c0_54, %c0_55], %100 {strides = array<i32>} : memref<1x1x3x128xf32, #tpu.memory_space<vmem>>, vector<1x1x3x128xf32>,
    %101 = arith.cmpi eq, %86, %88 : vector<32x128xi32>
    %102 = arith.select %101, %86, %88 : vector<32x128xi1>, vector<32x128xi32>
    %103 = arith.cmpi eq, %102, %90 : vector<32x128xi32>
    %c0_i32_56 = arith.constant 0 : i32
    %104 = vector.broadcast %c0_i32_56 : i32 to vector<32x128xi32>
    %105 = arith.select %103, %102, %104 : vector<32x128xi1>, vector<32x128xi32>
    %106 = arith.trunci %105 : vector<32x128xi32> to vector<32x128xi8>
    %c0_57 = arith.constant 0 : index
    %c0_58 = arith.constant 0 : index
    %c0_59 = arith.constant 0 : index
    %107 = vector.load %arg6[%c0_57, %c0_58, %c0_59] : memref<1x32x128xi8, #tpu.memory_space<vmem>>, vector<1x32x128xi8>
    %108 = vector.shape_cast %107 : vector<1x32x128xi8> to vector<32x128xi8>
    %109 = vector.shape_cast %106 : vector<32x128xi8> to vector<1x32x128xi8>
    tpu.vector_store %arg6[%c0_57, %c0_58, %c0_59], %109 {strides = array<i32>} : memref<1x32x128xi8, #tpu.memory_space<vmem>>, vector<1x32x128xi8>,
    return
  }
  func.func @transform_0(%arg0: i32, %arg1: i32) -> (i32, i32, i32, i32) {
    %c0_i32 = arith.constant 0 : i32
    %c0_i32_0 = arith.constant 0 : i32
    %c0_i32_1 = arith.constant 0 : i32
    return %arg0, %c0_i32, %arg1, %c0_i32_0 : i32, i32, i32, i32
  }
  func.func @transform_1(%arg0: i32, %arg1: i32) -> (i32, i32, i32, i32) {
    %c0_i32 = arith.constant 0 : i32
    %c0_i32_0 = arith.constant 0 : i32
    %c0_i32_1 = arith.constant 0 : i32
    return %arg0, %c0_i32, %arg1, %c0_i32_0 : i32, i32, i32, i32
  }
  func.func @transform_2(%arg0: i32, %arg1: i32) -> (i32, i32, i32, i32) {
    %c0_i32 = arith.constant 0 : i32
    %c0_i32_0 = arith.constant 0 : i32
    %c0_i32_1 = arith.constant 0 : i32
    return %arg0, %c0_i32, %arg1, %c0_i32_0 : i32, i32, i32, i32
  }
  func.func @transform_3(%arg0: i32, %arg1: i32) -> (i32, i32, i32, i32) {
    %c0_i32 = arith.constant 0 : i32
    %c0_i32_0 = arith.constant 0 : i32
    %c0_i32_1 = arith.constant 0 : i32
    return %arg0, %arg1, %c0_i32, %c0_i32_0 : i32, i32, i32, i32
  }
  func.func @transform_4(%arg0: i32, %arg1: i32) -> (i32, i32, i32) {
    %c0_i32 = arith.constant 0 : i32
    %c0_i32_0 = arith.constant 0 : i32
    return %arg0, %arg1, %c0_i32 : i32, i32, i32
  }
}

</mosaic_0001>

<llo_original>
// kernel: tpu_custom_call.1
$region0: #{tpu_custom_call.1}
  #allocation0 [shape = 'u32[]', space=smem, size = 0x4, offset = 0x4, fixed_abs, tag = 'smem constant byte address 0x4 - core index']
  #allocation1 [shape = 'u32[144,128]{1,0:T(1,128)}', space=vmem, size = 0x12000, scoped, tag = 'internal scratch']
  %s0 = inlined_call_operand.hbm [shape: f32[2,4,32,128], index: 0, kind: input, shape index: {}]
  %s1 = inlined_call_operand.hbm [shape: f32[2,4,32,128], index: 1, kind: input, shape index: {}]
  %s2 = inlined_call_operand.hbm [shape: f32[2,4,32,128], index: 2, kind: input, shape index: {}]
  %s3 = inlined_call_operand.vmem [shape: f32[2,1,3,128], index: 3, kind: output, shape index: {0}]
  %s4 = inlined_call_operand.hbm [shape: s8[2,32,128], index: 4, kind: output, shape index: {1}]
  %5 = xla_tuple %s3, %s4
  %s6 = sld [smem:[#allocation0]]
  $region65: #{tpu_custom_call.1} parent=0
    _
  %s8 = ssub.s32 1, %s6
  %s9 = scalar_select 0, %s8, %s6
  $region1: #{tpu_custom_call.1} parent=0
    #allocation2 [shape = 'u8[131072]{0}', space=vmem, size = 0x20000, scoped, tag = 'input window, operand 0']
    #allocation3 [shape = 's32[2]{0}', space=sflag, size = 0x8, scoped, tag = 'scoped memory for tpu_custom_call.1']
    #allocation4 [shape = 's32[2]{0}', space=sflag, size = 0x8, scoped, tag = 'scoped memory for tpu_custom_call.1']
    #allocation5 [shape = 'u8[131072]{0}', space=vmem, size = 0x20000, scoped, tag = 'input window, operand 1']
    #allocation6 [shape = 's32[2]{0}', space=sflag, size = 0x8, scoped, tag = 'scoped memory for tpu_custom_call.1']
    #allocation7 [shape = 'u8[131072]{0}', space=vmem, size = 0x20000, scoped, tag = 'input window, operand 2']
    #allocation8 [shape = 'u8[8192]{0}', space=vmem, size = 0x2000, scoped, tag = 'output window, operand 1']
    %10 = vsyncpa [#allocation3], 0
    %s11 = scalar_lea.sflag [#allocation3], 1
    %12 = vsyncpa %s11, 0
    %13 = vsyncpa [#allocation6], 0
    %s14 = scalar_lea.sflag [#allocation6], 1
    %15 = vsyncpa %s14, 0
    %16 = vsyncpa [#allocation4], 0
    %s17 = scalar_lea.sflag [#allocation4], 1
    %18 = vsyncpa %s17, 0
    loop: start=0, step=1, limit=4
    $region2: #{tpu_custom_call.1} parent=1 // loop_pre_header
      _
    $region3: #{tpu_custom_call.1} parent=1 // loop_header
      %s20 = sphi 0, %s24
      %p21 = scmp.ge.s32.totalorder %s20, 4
      %s27 = sphi 0, %s39
      %s28 = sphi 0, %s35
      %s29 = sphi 0, %s27
      %s30 = sphi 0, %s28
      %s31 = sphi 0, %s29
      %s32 = sphi 0, %s30
      %s44 = sphi 0, %s46
      %s47 = sphi 0, %s44
      %s48 = sphi 0, %s47
      %s64 = sphi 0, %s48
      %s72 = sphi 0, %s74
      %s75 = sphi 0, %s72
      %s76 = sphi 0, %s75
      %s92 = sphi 0, %s76
      %s100 = sphi 0, %s102
      %s103 = sphi 0, %s100
      %s104 = sphi 0, %s103
      %s120 = sphi 0, %s104
      %s128 = sphi 0, %s130
      %s131 = sphi 0, %s128
      %s132 = sphi 0, %s131
      %s148 = sphi 0, %s132
      %s156 = sphi 0, %s158
      %s159 = sphi 0, %s156
      %s160 = sphi 0, %s159
      %s176 = sphi 0, %s160
    $region4: #{tpu_custom_call.1} parent=1 // loop_header_branch
      %23 = sbr.rel (%p21) target = $region8
    $region5: #{tpu_custom_call.1} parent=1 // loop_body
      %s25 = ssub.s32 %s20, 1
      %s26 = ssub.s32 %s20, 2
      %s33 = sadd.s32 1, %s28
      %p34 = scmp.ge.s32.totalorder %s33, 1
      %s35 = scalar_select %p34, 0, %s33
      %s36 = sadd.s32 1, %s27
      %s37 = scalar_select %p34, %s36, %s27
      %p38 = scmp.ge.s32.totalorder %s37, 2
      %s39 = scalar_select %p38, 0, %s37
      %s40 = ssub.s32 %s27, %s39
      %s41 = ssub.s32 %s28, %s35
      %s42 = sor.u32 %s40, %s41
      %p43 = scmp.eq.s32.totalorder %s42, 0
      %s45 = sadd.s32 %s44, 1
      %s46 = scalar_select %p43, %s44, %s45
      %p49 = pneg %p43
      %p50 = scmp.eq.s32.totalorder %s20, 1
      %p51 = por %p49, %p50
      %p52 = scmp.ne.s32.totalorder %s44, %s47
      %p53 = scmp.eq.s32.totalorder %s20, 0
      %p54 = por %p52, %p53
      %p55 = scmp.ne.s32.totalorder %s44, %s47
      %p56 = scmp.eq.s32.totalorder %s25, 1
      %p57 = por %p55, %p56
      %p58 = scmp.ne.s32.totalorder %s47, %s48
      %p59 = scmp.eq.s32.totalorder %s25, 0
      %p60 = por %p58, %p59
      %p61 = scmp.ne.s32.totalorder %s47, %s48
      %p62 = scmp.eq.s32.totalorder %s26, 1
      %p63 = por %p61, %p62
      %p65 = scmp.ne.s32.totalorder %s48, %s64
      %p66 = scmp.eq.s32.totalorder %s26, 0
      %p67 = por %p65, %p66
      %s68 = ssub.s32 %s27, %s39
      %s69 = ssub.s32 %s28, %s35
      %s70 = sor.u32 %s68, %s69
      %p71 = scmp.eq.s32.totalorder %s70, 0
      %s73 = sadd.s32 %s72, 1
      %s74 = scalar_select %p71, %s72, %s73
      %p77 = pneg %p71
      %p78 = scmp.eq.s32.totalorder %s20, 1
      %p79 = por %p77, %p78
      %p80 = scmp.ne.s32.totalorder %s72, %s75
      %p81 = scmp.eq.s32.totalorder %s20, 0
      %p82 = por %p80, %p81
      %p83 = scmp.ne.s32.totalorder %s72, %s75
      %p84 = scmp.eq.s32.totalorder %s25, 1
      %p85 = por %p83, %p84
      %p86 = scmp.ne.s32.totalorder %s75, %s76
      %p87 = scmp.eq.s32.totalorder %s25, 0
      %p88 = por %p86, %p87
      %p89 = scmp.ne.s32.totalorder %s75, %s76
      %p90 = scmp.eq.s32.totalorder %s26, 1
      %p91 = por %p89, %p90
      %p93 = scmp.ne.s32.totalorder %s76, %s92
      %p94 = scmp.eq.s32.totalorder %s26, 0
      %p95 = por %p93, %p94
      %s96 = ssub.s32 %s27, %s39
      %s97 = ssub.s32 %s28, %s35
      %s98 = sor.u32 %s96, %s97
      %p99 = scmp.eq.s32.totalorder %s98, 0
      %s101 = sadd.s32 %s100, 1
      %s102 = scalar_select %p99, %s100, %s101
      %p105 = pneg %p99
      %p106 = scmp.eq.s32.totalorder %s20, 1
      %p107 = por %p105, %p106
      %p108 = scmp.ne.s32.totalorder %s100, %s103
      %p109 = scmp.eq.s32.totalorder %s20, 0
      %p110 = por %p108, %p109
      %p111 = scmp.ne.s32.totalorder %s100, %s103
      %p112 = scmp.eq.s32.totalorder %s25, 1
      %p113 = por %p111, %p112
      %p114 = scmp.ne.s32.totalorder %s103, %s104
      %p115 = scmp.eq.s32.totalorder %s25, 0
      %p116 = por %p114, %p115
      %p117 = scmp.ne.s32.totalorder %s103, %s104
      %p118 = scmp.eq.s32.totalorder %s26, 1
      %p119 = por %p117, %p118
      %p121 = scmp.ne.s32.totalorder %s104, %s120
      %p122 = scmp.eq.s32.totalorder %s26, 0
      %p123 = por %p121, %p122
      %s124 = ssub.s32 %s27, %s39
      %s125 = ssub.s32 %s28, %s35
      %s126 = sor.u32 %s124, %s125
      %p127 = scmp.eq.s32.totalorder %s126, 0
      %s129 = sadd.s32 %s128, 1
      %s130 = scalar_select %p127, %s128, %s129
      %p133 = pneg %p127
      %p134 = scmp.eq.s32.totalorder %s20, 1
      %p135 = por %p133, %p134
      %p136 = scmp.ne.s32.totalorder %s128, %s131
      %p137 = scmp.eq.s32.totalorder %s20, 0
      %p138 = por %p136, %p137
      %p139 = scmp.ne.s32.totalorder %s128, %s131
      %p140 = scmp.eq.s32.totalorder %s25, 1
      %p141 = por %p139, %p140
      %p142 = scmp.ne.s32.totalorder %s131, %s132
      %p143 = scmp.eq.s32.totalorder %s25, 0
      %p144 = por %p142, %p143
      %p145 = scmp.ne.s32.totalorder %s131, %s132
      %p146 = scmp.eq.s32.totalorder %s26, 1
      %p147 = por %p145, %p146
      %p149 = scmp.ne.s32.totalorder %s132, %s148
      %p150 = scmp.eq.s32.totalorder %s26, 0
      %p151 = por %p149, %p150
      %s152 = ssub.s32 %s27, %s39
      %s153 = ssub.s32 %s28, %s35
      %s154 = sor.u32 %s152, %s153
      %p155 = scmp.eq.s32.totalorder %s154, 0
      %s157 = sadd.s32 %s156, 1
      %s158 = scalar_select %p155, %s156, %s157
      %p161 = pneg %p155
      %p162 = scmp.eq.s32.totalorder %s20, 1
      %p163 = por %p161, %p162
      %p164 = scmp.ne.s32.totalorder %s156, %s159
      %p165 = scmp.eq.s32.totalorder %s20, 0
      %p166 = por %p164, %p165
      %p167 = scmp.ne.s32.totalorder %s156, %s159
      %p168 = scmp.eq.s32.totalorder %s25, 1
      %p169 = por %p167, %p168
      %p170 = scmp.ne.s32.totalorder %s159, %s160
      %p171 = scmp.eq.s32.totalorder %s25, 0
      %p172 = por %p170, %p171
      %p173 = scmp.ne.s32.totalorder %s159, %s160
      %p174 = scmp.eq.s32.totalorder %s26, 1
      %p175 = por %p173, %p174
      %p177 = scmp.ne.s32.totalorder %s160, %s176
      %p178 = scmp.eq.s32.totalorder %s26, 0
      %p179 = por %p177, %p178
      %p180 = scmp.le.s32.totalorder 1, %s20
      %p181 = scmp.lt.s32.totalorder %s20, 3
      %p182 = pnand %p180, %p181
      %p183 = pneg %p182
      // Predicated region
      $region9: #{tpu_custom_call.1} parent=5 // pred_check
        _
      $region10: #{tpu_custom_call.1} parent=5 // pred_check_branch
        %185 = sbr.rel (%p182) target = $region12
      $region11: #{tpu_custom_call.1} parent=5 // pred_region
        %s186 = ssub.s32 %s20, 1
      $region12: #{tpu_custom_call.1} parent=5 // pred_fallthru
        _
      %p187 = scmp.lt.s32.totalorder %s20, 2
      // Predicated region
      $region13: #{tpu_custom_call.1} parent=5 // pred_check
        %p188 = pneg %p187
      $region14: #{tpu_custom_call.1} parent=5 // pred_check_branch
        %190 = sbr.rel (%p188) target = $region16
      $region15: #{tpu_custom_call.1} parent=5 // pred_region
        // Predicated region
        $region17: #{tpu_custom_call.1} parent=15 // pred_check
          %p191 = pneg %p54
        $region18: #{tpu_custom_call.1} parent=15 // pred_check_branch
          %193 = sbr.rel (%p191) target = $region20
        $region19: #{tpu_custom_call.1} parent=15 // pred_region
          %s194 = sand.u32 %s44, 1
          %s195 = scalar_lea.sflag [#allocation3], %s194
          %s196 = sand.u32 %s44, 1
          %s197 = smul.addr %s196, 128
          %s198 = scalar_lea.vmem [#allocation2], %s197
          %s199 = smul.u32 4, %s28
          %s201 = ssub.s32 2048, 2048
          %202 = vsyncadd %s195, %s201
          %s203 = smul.addr %s27, 16
          %s204 = sadd.s32 %s199, %s203
          %s205 = smul.addr %s204, 128
          %s206 = scalar_lea.hbm %s0, %s205
          %s207 = sshll.u32 %s198, 4
          %s208 = int_to_ptr.vmem [resolvable:$true] %s207
          %213 = dma.hbm_to_vmem [thread:$0]  %s206, 2048, %s208, %s195, 128, 128, 8
        $region20: #{tpu_custom_call.1} parent=15 // pred_fallthru
          _
        // Predicated region
        $region21: #{tpu_custom_call.1} parent=15 // pred_check
          %p214 = pneg %p82
        $region22: #{tpu_custom_call.1} parent=15 // pred_check_branch
          %216 = sbr.rel (%p214) target = $region24
        $region23: #{tpu_custom_call.1} parent=15 // pred_region
          %s217 = sand.u32 %s20, 1
          %s218 = scalar_lea.sflag [#allocation6], %s217
          %s219 = sand.u32 %s72, 1
          %s220 = smul.addr %s219, 128
          %s221 = scalar_lea.vmem [#allocation5], %s220
          %s222 = smul.u32 4, %s28
          %s224 = ssub.s32 2048, 2048
          %225 = vsyncadd %s218, %s224
          %s226 = smul.addr %s27, 16
          %s227 = sadd.s32 %s222, %s226
          %s228 = smul.addr %s227, 128
          %s229 = scalar_lea.hbm %s1, %s228
          %s230 = sshll.u32 %s221, 4
          %s231 = int_to_ptr.vmem [resolvable:$true] %s230
          %236 = dma.hbm_to_vmem [thread:$0]  %s229, 2048, %s231, %s218, 128, 128, 8
        $region24: #{tpu_custom_call.1} parent=15 // pred_fallthru
          _
        // Predicated region
        $region25: #{tpu_custom_call.1} parent=15 // pred_check
          %p237 = pneg %p110
        $region26: #{tpu_custom_call.1} parent=15 // pred_check_branch
          %239 = sbr.rel (%p237) target = $region28
        $region27: #{tpu_custom_call.1} parent=15 // pred_region
          %s240 = sand.u32 %s20, 1
          %s241 = scalar_lea.sflag [#allocation6], %s240
          %s242 = sand.u32 %s100, 1
          %s243 = smul.addr %s242, 128
          %s244 = scalar_lea.vmem [#allocation7], %s243
          %s245 = smul.u32 4, %s28
          %s247 = ssub.s32 2048, 2048
          %248 = vsyncadd %s241, %s247
          %s249 = smul.addr %s27, 16
          %s250 = sadd.s32 %s245, %s249
          %s251 = smul.addr %s250, 128
          %s252 = scalar_lea.hbm %s2, %s251
          %s253 = sshll.u32 %s244, 4
          %s254 = int_to_ptr.vmem [resolvable:$true] %s253
          %259 = dma.hbm_to_vmem [thread:$0]  %s252, 2048, %s254, %s241, 128, 128, 8
        $region28: #{tpu_custom_call.1} parent=15 // pred_fallthru
          _
      $region16: #{tpu_custom_call.1} parent=5 // pred_fallthru
        _
      %p260 = scmp.le.s32.totalorder 1, %s20
      %p261 = scmp.lt.s32.totalorder %s20, 3
      %p262 = pnand %p260, %p261
      %p263 = pneg %p262
      // Predicated region
      $region29: #{tpu_custom_call.1} parent=5 // pred_check
        _
      $region30: #{tpu_custom_call.1} parent=5 // pred_check_branch
        %265 = sbr.rel (%p262) target = $region32
      $region31: #{tpu_custom_call.1} parent=5 // pred_region
        %s266 = ssub.s32 %s20, 1
        %s267 = sand.u32 %s47, 1
        %s268 = scalar_lea.sflag [#allocation3], %s267
        %s269 = sand.u32 %s47, 1
        %s270 = smul.addr %s269, 128
        %s271 = scalar_lea.vmem [#allocation2], %s270
        // Predicated region
        $region33: #{tpu_custom_call.1} parent=31 // pred_check
          %p272 = pneg %p60
        $region34: #{tpu_custom_call.1} parent=31 // pred_check_branch
          %274 = sbr.rel (%p272) target = $region36
        $region35: #{tpu_custom_call.1} parent=31 // pred_region
          %275 = dma.done %s268, 2048
        $region36: #{tpu_custom_call.1} parent=31 // pred_fallthru
          _
        %s276 = sand.u32 %s25, 1
        %s277 = scalar_lea.sflag [#allocation6], %s276
        %s278 = sand.u32 %s75, 1
        %s279 = smul.addr %s278, 128
        %s280 = scalar_lea.vmem [#allocation5], %s279
        // Predicated region
        $region37: #{tpu_custom_call.1} parent=31 // pred_check
          %p281 = pneg %p88
        $region38: #{tpu_custom_call.1} parent=31 // pred_check_branch
          %283 = sbr.rel (%p281) target = $region40
        $region39: #{tpu_custom_call.1} parent=31 // pred_region
          %284 = dma.done %s277, 2048
        $region40: #{tpu_custom_call.1} parent=31 // pred_fallthru
          _
        %s285 = sand.u32 %s25, 1
        %s286 = scalar_lea.sflag [#allocation6], %s285
        %s287 = sand.u32 %s103, 1
        %s288 = smul.addr %s287, 128
        %s289 = scalar_lea.vmem [#allocation7], %s288
        // Predicated region
        $region41: #{tpu_custom_call.1} parent=31 // pred_check
          %p290 = pneg %p116
        $region42: #{tpu_custom_call.1} parent=31 // pred_check_branch
          %292 = sbr.rel (%p290) target = $region44
        $region43: #{tpu_custom_call.1} parent=31 // pred_region
          %293 = dma.done %s286, 2048
        $region44: #{tpu_custom_call.1} parent=31 // pred_fallthru
          _
        %s294 = sand.u32 %s47, 1
        %s295 = scalar_lea.sflag [#allocation3], %s294
        %s296 = sand.u32 %s47, 1
        %s297 = smul.addr %s296, 128
        %s298 = scalar_lea.vmem [#allocation2], %s297
        %p299 = pneg %p60
        %p300 = pneg %p57
        %s301 = sand.u32 %s25, 1
        %s302 = scalar_lea.sflag [#allocation6], %s301
        %s303 = sand.u32 %s75, 1
        %s304 = smul.addr %s303, 128
        %s305 = scalar_lea.vmem [#allocation5], %s304
        %p306 = pneg %p88
        %p307 = pneg %p85
        %s308 = sand.u32 %s25, 1
        %s309 = scalar_lea.sflag [#allocation6], %s308
        %s310 = sand.u32 %s103, 1
        %s311 = smul.addr %s310, 128
        %s312 = scalar_lea.vmem [#allocation7], %s311
        %p313 = pneg %p116
        %p314 = pneg %p113
        %p315 = pneg %p144
        %p316 = pneg %p141
        %p317 = scmp.lt.s32.totalorder %s29, 1
        %s318 = scalar_select %p317, %s29, 1
        %p319 = scmp.lt.s32.totalorder %s30, 0
        %s320 = scalar_select %p319, %s30, 0
        %s321 = sadd.s32 %s320, %s318
        %s322 = smul.addr %s321, 4
        %s323 = scalar_lea.vmem %s3, %s322
        %p324 = pneg %p172
        %p325 = pneg %p169
        %s326 = sand.u32 %s159, 1
        %s327 = scalar_lea.sflag [#allocation4], %s326
        %s328 = sand.u32 %s159, 1
        %s329 = smul.addr %s328, 8
        %s330 = scalar_lea.vmem [#allocation8], %s329
        %s331 = smul.u32 4, %s30
        %s332 = smul.u32 4, %s30
        %s333 = smul.u32 4, %s30
        %p334 = scmp.lt.s32.totalorder %s29, 1
        %s335 = scalar_select %p334, %s29, 1
        %p336 = scmp.lt.s32.totalorder %s30, 0
        %s337 = scalar_select %p336, %s30, 0
        %s338 = sadd.s32 %s337, %s335
        %s339 = smul.addr %s338, 4
        %s340 = scalar_lea.vmem %s3, %s339
        %v341 = vld [vmem:[%s271] sm:$0xff]
        %v342 = vld [vmem:[%s271 + $0x8] sm:$0xff]
        %v343 = vld [vmem:[%s271 + $0x10] sm:$0xff]
        %v344 = vld [vmem:[%s271 + $0x18] sm:$0xff]
        %v345 = vld [vmem:[%s280] sm:$0xff]
        %v346 = vld [vmem:[%s280 + $0x8] sm:$0xff]
        %v347 = vld [vmem:[%s280 + $0x10] sm:$0xff]
        %v348 = vld [vmem:[%s280 + $0x18] sm:$0xff]
        %v349 = vld [vmem:[%s289] sm:$0xff]
        %v350 = vld [vmem:[%s289 + $0x8] sm:$0xff]
        %v351 = vld [vmem:[%s289 + $0x10] sm:$0xff]
        %v352 = vld [vmem:[%s289 + $0x18] sm:$0xff]
        %v353 = vsub.f32 %v341, %v345
        %v354 = vsub.f32 %v342, %v346
        %v355 = vsub.f32 %v343, %v347
        %v356 = vsub.f32 %v344, %v348
        %v357 = vsub.f32 %v345, %v349
        %v358 = vsub.f32 %v346, %v350
        %v359 = vsub.f32 %v347, %v351
        %v360 = vsub.f32 %v348, %v352
        %v361 = vsub.f32 %v349, %v341
        %v362 = vsub.f32 %v350, %v342
        %v363 = vsub.f32 %v351, %v343
        %v364 = vsub.f32 %v352, %v344
        %v365 = vmul.f32 %v353, %v353
        %v366 = vmul.f32 %v354, %v354
        %v367 = vmul.f32 %v355, %v355
        %v368 = vmul.f32 %v356, %v356
        %v369 = vmul.f32 %v357, %v357
        %v370 = vmul.f32 %v358, %v358
        %v371 = vmul.f32 %v359, %v359
        %v372 = vmul.f32 %v360, %v360
        %v373 = vmul.f32 %v361, %v361
        %v374 = vmul.f32 %v362, %v362
        %v375 = vmul.f32 %v363, %v363
        %v376 = vmul.f32 %v364, %v364
        %s377 = scalar_lea.vmem %s271, 32 [#allocation2]
        %v378 = vld [vmem:[%s377] sm:$0xff]
        %v379 = vld [vmem:[%s377 + $0x8] sm:$0xff]
        %v380 = vld [vmem:[%s377 + $0x10] sm:$0xff]
        %v381 = vld [vmem:[%s377 + $0x18] sm:$0xff]
        %s382 = scalar_lea.vmem %s280, 32 [#allocation5]
        %v383 = vld [vmem:[%s382] sm:$0xff]
        %v384 = vld [vmem:[%s382 + $0x8] sm:$0xff]
        %v385 = vld [vmem:[%s382 + $0x10] sm:$0xff]
        %v386 = vld [vmem:[%s382 + $0x18] sm:$0xff]
        %s387 = scalar_lea.vmem %s289, 32 [#allocation7]
        %v388 = vld [vmem:[%s387] sm:$0xff]
        %v389 = vld [vmem:[%s387 + $0x8] sm:$0xff]
        %v390 = vld [vmem:[%s387 + $0x10] sm:$0xff]
        %v391 = vld [vmem:[%s387 + $0x18] sm:$0xff]
        %v392 = vsub.f32 %v378, %v383
        %v393 = vsub.f32 %v379, %v384
        %v394 = vsub.f32 %v380, %v385
        %v395 = vsub.f32 %v381, %v386
        %v396 = vsub.f32 %v383, %v388
        %v397 = vsub.f32 %v384, %v389
        %v398 = vsub.f32 %v385, %v390
        %v399 = vsub.f32 %v386, %v391
        %v400 = vsub.f32 %v388, %v378
        %v401 = vsub.f32 %v389, %v379
        %v402 = vsub.f32 %v390, %v380
        %v403 = vsub.f32 %v391, %v381
        %v404 = vmul.f32 %v392, %v392
        %v405 = vmul.f32 %v393, %v393
        %v406 = vmul.f32 %v394, %v394
        %v407 = vmul.f32 %v395, %v395
        %v408 = vadd.f32 %v365, %v404
        %v409 = vadd.f32 %v366, %v405
        %v410 = vadd.f32 %v367, %v406
        %v411 = vadd.f32 %v368, %v407
        %v412 = vmul.f32 %v396, %v396
        %v413 = vmul.f32 %v397, %v397
        %v414 = vmul.f32 %v398, %v398
        %v415 = vmul.f32 %v399, %v399
        %v416 = vadd.f32 %v369, %v412
        %v417 = vadd.f32 %v370, %v413
        %v418 = vadd.f32 %v371, %v414
        %v419 = vadd.f32 %v372, %v415
        %v420 = vmul.f32 %v400, %v400
        %v421 = vmul.f32 %v401, %v401
        %v422 = vmul.f32 %v402, %v402
        %v423 = vmul.f32 %v403, %v403
        %v424 = vadd.f32 %v373, %v420
        %v425 = vadd.f32 %v374, %v421
        %v426 = vadd.f32 %v375, %v422
        %v427 = vadd.f32 %v376, %v423
        %vm428 = vcmp.gt.f32.partialorder %v383, %v345
        %vm429 = vcmp.gt.f32.partialorder %v384, %v346
        %vm430 = vcmp.gt.f32.partialorder %v385, %v347
        %vm431 = vcmp.gt.f32.partialorder %v386, %v348
        %vm432 = vcmp.gt.f32.partialorder %v388, %v349
        %vm433 = vcmp.gt.f32.partialorder %v389, %v350
        %vm434 = vcmp.gt.f32.partialorder %v390, %v351
        %vm435 = vcmp.gt.f32.partialorder %v391, %v352
        %v436 = vsel %vm428, %v383, %v345
        %v437 = vsel %vm429, %v384, %v346
        %v438 = vsel %vm430, %v385, %v347
        %v439 = vsel %vm431, %v386, %v348
        %v440 = vsel %vm432, %v388, %v349
        %v441 = vsel %vm433, %v389, %v350
        %v442 = vsel %vm434, %v390, %v351
        %v443 = vsel %vm435, %v391, %v352
        %v444 = vsel %vm428, 1, 0
        %v445 = vsel %vm429, 1, 0
        %v446 = vsel %vm430, 1, 0
        %v447 = vsel %vm431, 1, 0
        %v448 = vsel %vm432, 1, 0
        %v449 = vsel %vm433, 1, 0
        %v450 = vsel %vm434, 1, 0
        %v451 = vsel %vm435, 1, 0
        %s452 = scalar_lea.vmem %s271, 64 [#allocation2]
        %v453 = vld [vmem:[%s452] sm:$0xff]
        %v454 = vld [vmem:[%s452 + $0x8] sm:$0xff]
        %v455 = vld [vmem:[%s452 + $0x10] sm:$0xff]
        %v456 = vld [vmem:[%s452 + $0x18] sm:$0xff]
        %s457 = scalar_lea.vmem %s280, 64 [#allocation5]
        %v458 = vld [vmem:[%s457] sm:$0xff]
        %v459 = vld [vmem:[%s457 + $0x8] sm:$0xff]
        %v460 = vld [vmem:[%s457 + $0x10] sm:$0xff]
        %v461 = vld [vmem:[%s457 + $0x18] sm:$0xff]
        %s462 = scalar_lea.vmem %s289, 64 [#allocation7]
        %v463 = vld [vmem:[%s462] sm:$0xff]
        %v464 = vld [vmem:[%s462 + $0x8] sm:$0xff]
        %v465 = vld [vmem:[%s462 + $0x10] sm:$0xff]
        %v466 = vld [vmem:[%s462 + $0x18] sm:$0xff]
        %v467 = vsub.f32 %v453, %v458
        %v468 = vsub.f32 %v454, %v459
        %v469 = vsub.f32 %v455, %v460
        %v470 = vsub.f32 %v456, %v461
        %v471 = vsub.f32 %v458, %v463
        %v472 = vsub.f32 %v459, %v464
        %v473 = vsub.f32 %v460, %v465
        %v474 = vsub.f32 %v461, %v466
        %v475 = vsub.f32 %v463, %v453
        %v476 = vsub.f32 %v464, %v454
        %v477 = vsub.f32 %v465, %v455
        %v478 = vsub.f32 %v466, %v456
        %v479 = vmul.f32 %v467, %v467
        %v480 = vmul.f32 %v468, %v468
        %v481 = vmul.f32 %v469, %v469
        %v482 = vmul.f32 %v470, %v470
        %v483 = vadd.f32 %v408, %v479
        %v484 = vadd.f32 %v409, %v480
        %v485 = vadd.f32 %v410, %v481
        %v486 = vadd.f32 %v411, %v482
        %v487 = vmul.f32 %v471, %v471
        %v488 = vmul.f32 %v472, %v472
        %v489 = vmul.f32 %v473, %v473
        %v490 = vmul.f32 %v474, %v474
        %v491 = vadd.f32 %v416, %v487
        %v492 = vadd.f32 %v417, %v488
        %v493 = vadd.f32 %v418, %v489
        %v494 = vadd.f32 %v419, %v490
        %v495 = vmul.f32 %v475, %v475
        %v496 = vmul.f32 %v476, %v476
        %v497 = vmul.f32 %v477, %v477
        %v498 = vmul.f32 %v478, %v478
        %v499 = vadd.f32 %v424, %v495
        %v500 = vadd.f32 %v425, %v496
        %v501 = vadd.f32 %v426, %v497
        %v502 = vadd.f32 %v427, %v498
        %vm503 = vcmp.gt.f32.partialorder %v458, %v436
        %vm504 = vcmp.gt.f32.partialorder %v459, %v437
        %vm505 = vcmp.gt.f32.partialorder %v460, %v438
        %vm506 = vcmp.gt.f32.partialorder %v461, %v439
        %vm507 = vcmp.gt.f32.partialorder %v463, %v440
        %vm508 = vcmp.gt.f32.partialorder %v464, %v441
        %vm509 = vcmp.gt.f32.partialorder %v465, %v442
        %vm510 = vcmp.gt.f32.partialorder %v466, %v443
        %v511 = vsel %vm503, %v458, %v436
        %v512 = vsel %vm504, %v459, %v437
        %v513 = vsel %vm505, %v460, %v438
        %v514 = vsel %vm506, %v461, %v439
        %v515 = vsel %vm507, %v463, %v440
        %v516 = vsel %vm508, %v464, %v441
        %v517 = vsel %vm509, %v465, %v442
        %v518 = vsel %vm510, %v466, %v443
        %v519 = vsel %vm503, 2, %v444
        %v520 = vsel %vm504, 2, %v445
        %v521 = vsel %vm505, 2, %v446
        %v522 = vsel %vm506, 2, %v447
        %v523 = vsel %vm507, 2, %v448
        %v524 = vsel %vm508, 2, %v449
        %v525 = vsel %vm509, 2, %v450
        %v526 = vsel %vm510, 2, %v451
        %s527 = scalar_lea.vmem %s271, 96 [#allocation2]
        %v528 = vld [vmem:[%s527] sm:$0xff]
        %v529 = vld [vmem:[%s527 + $0x8] sm:$0xff]
        %v530 = vld [vmem:[%s527 + $0x10] sm:$0xff]
        %v531 = vld [vmem:[%s527 + $0x18] sm:$0xff]
        %s532 = scalar_lea.vmem %s280, 96 [#allocation5]
        %v533 = vld [vmem:[%s532] sm:$0xff]
        %v534 = vld [vmem:[%s532 + $0x8] sm:$0xff]
        %v535 = vld [vmem:[%s532 + $0x10] sm:$0xff]
        %v536 = vld [vmem:[%s532 + $0x18] sm:$0xff]
        %s537 = scalar_lea.vmem %s289, 96 [#allocation7]
        %v538 = vld [vmem:[%s537] sm:$0xff]
        %v539 = vld [vmem:[%s537 + $0x8] sm:$0xff]
        %v540 = vld [vmem:[%s537 + $0x10] sm:$0xff]
        %v541 = vld [vmem:[%s537 + $0x18] sm:$0xff]
        %v542 = vsub.f32 %v528, %v533
        %v543 = vsub.f32 %v529, %v534
        %v544 = vsub.f32 %v530, %v535
        %v545 = vsub.f32 %v531, %v536
        %v546 = vsub.f32 %v533, %v538
        %v547 = vsub.f32 %v534, %v539
        %v548 = vsub.f32 %v535, %v540
        %v549 = vsub.f32 %v536, %v541
        %v550 = vsub.f32 %v538, %v528
        %v551 = vsub.f32 %v539, %v529
        %v552 = vsub.f32 %v540, %v530
        %v553 = vsub.f32 %v541, %v531
        %v554 = vmul.f32 %v542, %v542
        %v555 = vmul.f32 %v543, %v543
        %v556 = vmul.f32 %v544, %v544
        %v557 = vmul.f32 %v545, %v545
        %v558 = vadd.f32 %v483, %v554
        %v559 = vadd.f32 %v484, %v555
        %v560 = vadd.f32 %v485, %v556
        %v561 = vadd.f32 %v486, %v557
        %v562 = vmul.f32 %v546, %v546
        %v563 = vmul.f32 %v547, %v547
        %v564 = vmul.f32 %v548, %v548
        %v565 = vmul.f32 %v549, %v549
        %v566 = vadd.f32 %v491, %v562
        %v567 = vadd.f32 %v492, %v563
        %v568 = vadd.f32 %v493, %v564
        %v569 = vadd.f32 %v494, %v565
        %v570 = vmul.f32 %v550, %v550
        %v571 = vmul.f32 %v551, %v551
        %v572 = vmul.f32 %v552, %v552
        %v573 = vmul.f32 %v553, %v553
        %v574 = vadd.f32 %v499, %v570
        %v575 = vadd.f32 %v500, %v571
        %v576 = vadd.f32 %v501, %v572
        %v577 = vadd.f32 %v502, %v573
        %vm578 = vcmp.gt.f32.partialorder %v533, %v511
        %vm579 = vcmp.gt.f32.partialorder %v534, %v512
        %vm580 = vcmp.gt.f32.partialorder %v535, %v513
        %vm581 = vcmp.gt.f32.partialorder %v536, %v514
        %vm582 = vcmp.gt.f32.partialorder %v538, %v515
        %vm583 = vcmp.gt.f32.partialorder %v539, %v516
        %vm584 = vcmp.gt.f32.partialorder %v540, %v517
        %vm585 = vcmp.gt.f32.partialorder %v541, %v518
        %v586 = vsel %vm578, 3, %v519
        %v587 = vsel %vm579, 3, %v520
        %v588 = vsel %vm580, 3, %v521
        %v589 = vsel %vm581, 3, %v522
        %v590 = vsel %vm582, 3, %v523
        %v591 = vsel %vm583, 3, %v524
        %v592 = vsel %vm584, 3, %v525
        %v593 = vsel %vm585, 3, %v526
        %v594 = vadd.f32 %v558, %v559
        %v595 = vadd.f32 %v594, %v560
        %v596 = vadd.f32 %v595, %v561
        %v597 = vrot.slane %v596, 4
        %v598 = vadd.f32 %v596, %v597
        %v599 = vrot.slane %v598, 2
        %v600 = vadd.f32 %v598, %v599
        %v601 = vrot.slane %v600, 1
        %v602 = vadd.f32 %v600, %v601
        %v603 = vadd.f32 %v566, %v567
        %v604 = vadd.f32 %v603, %v568
        %v605 = vadd.f32 %v604, %v569
        %v606 = vrot.slane %v605, 4
        %v607 = vadd.f32 %v605, %v606
        %v608 = vrot.slane %v607, 2
        %v609 = vadd.f32 %v607, %v608
        %v610 = vrot.slane %v609, 1
        %v611 = vadd.f32 %v609, %v610
        %v612 = vadd.f32 %v574, %v575
        %v613 = vadd.f32 %v612, %v576
        %v614 = vadd.f32 %v613, %v577
        %v615 = vrot.slane %v614, 4
        %v616 = vadd.f32 %v614, %v615
        %v617 = vrot.slane %v616, 2
        %v618 = vadd.f32 %v616, %v617
        %v619 = vrot.slane %v618, 1
        %v620 = vadd.f32 %v618, %v619
        %vm621 = vcmask 1040384
        %v622 = vsel %vm621, %v602, %v611
        %vm623 = vcmask 1041408
        %v624 = vsel %vm623, %v622, %v620
        %625 = vst [vmem:[%s340] sm:$0x7] %v624
        %vm626 = vcmp.eq.s32.totalorder %v586, %v590
        %vm627 = vcmp.eq.s32.totalorder %v587, %v591
        %vm628 = vcmp.eq.s32.totalorder %v588, %v592
        %vm629 = vcmp.eq.s32.totalorder %v589, %v593
        %v630 = vsel %vm626, %v586, 0
        %v631 = vsel %vm627, %v587, 0
        %v632 = vsel %vm628, %v588, 0
        %v633 = vsel %vm629, %v589, 0
        %v634 = vpack.c.b16 %v631, %v630
        %v635 = vpack.c.b16 %v633, %v632
        %v636 = vpack.c.b8 %v635, %v634
        %637 = vst [vmem:[%s330] sm:$0xff] %v636
        %p638 = scmp.lt.s32.totalorder %s29, 1
        %s639 = scalar_select %p638, %s29, 1
        %p640 = scmp.lt.s32.totalorder %s30, 0
        %s641 = scalar_select %p640, %s30, 0
        %s642 = sadd.s32 %s641, %s639
        %s643 = smul.addr %s642, 4
        %s644 = scalar_lea.vmem %s3, %s643
        %s645 = sand.u32 %s159, 1
        %s646 = scalar_lea.sflag [#allocation4], %s645
        %s647 = sand.u32 %s159, 1
        %s648 = smul.addr %s647, 8
        %s649 = scalar_lea.vmem [#allocation8], %s648
        // Predicated region
        $region45: #{tpu_custom_call.1} parent=31 // pred_check
          %p650 = pneg %p141
        $region46: #{tpu_custom_call.1} parent=31 // pred_check_branch
          %652 = sbr.rel (%p650) target = $region48
        $region47: #{tpu_custom_call.1} parent=31 // pred_region
          _
        $region48: #{tpu_custom_call.1} parent=31 // pred_fallthru
          _
        // Predicated region
        $region49: #{tpu_custom_call.1} parent=31 // pred_check
          %p653 = pneg %p169
        $region50: #{tpu_custom_call.1} parent=31 // pred_check_branch
          %655 = sbr.rel (%p653) target = $region52
        $region51: #{tpu_custom_call.1} parent=31 // pred_region
          %s657 = ssub.s32 128, 128
          %658 = vsyncadd %s646, %s657
          %s659 = sadd.s32 %s30, %s29
          %s660 = smul.addr %s659, 128
          %s661 = scalar_lea.hbm %s4, %s660
          %s663 = sshll.u32 %s649, 4
          %s664 = int_to_ptr.vmem [resolvable:$true] %s663
          %666 = dma.vmem_to_hbm [thread:$0]  %s664, 128, %s661, %s646
        $region52: #{tpu_custom_call.1} parent=31 // pred_fallthru
          _
      $region32: #{tpu_custom_call.1} parent=5 // pred_fallthru
        _
      %p667 = scmp.le.s32.totalorder 2, %s20
      // Predicated region
      $region53: #{tpu_custom_call.1} parent=5 // pred_check
        %p668 = pneg %p667
      $region54: #{tpu_custom_call.1} parent=5 // pred_check_branch
        %670 = sbr.rel (%p668) target = $region56
      $region55: #{tpu_custom_call.1} parent=5 // pred_region
        %s671 = ssub.s32 %s20, 2
        // Predicated region
        $region57: #{tpu_custom_call.1} parent=55 // pred_check
          %p672 = pneg %p147
        $region58: #{tpu_custom_call.1} parent=55 // pred_check_branch
          %674 = sbr.rel (%p672) target = $region60
        $region59: #{tpu_custom_call.1} parent=55 // pred_region
          %p675 = scmp.lt.s32.totalorder %s31, 1
          %s676 = scalar_select %p675, %s31, 1
          %p677 = scmp.lt.s32.totalorder %s32, 0
          %s678 = scalar_select %p677, %s32, 0
          %s679 = sadd.s32 %s678, %s676
          %s680 = smul.addr %s679, 4
          %s681 = scalar_lea.vmem %s3, %s680
        $region60: #{tpu_custom_call.1} parent=55 // pred_fallthru
          _
        // Predicated region
        $region61: #{tpu_custom_call.1} parent=55 // pred_check
          %p682 = pneg %p175
        $region62: #{tpu_custom_call.1} parent=55 // pred_check_branch
          %684 = sbr.rel (%p682) target = $region64
        $region63: #{tpu_custom_call.1} parent=55 // pred_region
          %s685 = sand.u32 %s160, 1
          %s686 = scalar_lea.sflag [#allocation4], %s685
          %s687 = sand.u32 %s160, 1
          %s688 = smul.addr %s687, 8
          %s689 = scalar_lea.vmem [#allocation8], %s688
          %690 = dma.done %s686, 128
        $region64: #{tpu_custom_call.1} parent=55 // pred_fallthru
          _
      $region56: #{tpu_custom_call.1} parent=5 // pred_fallthru
        _
    $region6: #{tpu_custom_call.1} parent=1 // loop_footer
      %s24 = sadd.s32 1, %s20
    $region7: #{tpu_custom_call.1} parent=1 // loop_footer_branch
      %19 = sbr.rel target = $region3
    $region8: #{tpu_custom_call.1} parent=1 // loop_exit
      _
    %691 = vsyncpa [#allocation3], 1
    %s692 = scalar_lea.sflag [#allocation3], 1
    %693 = vsyncpa %s692, 1
    %694 = vsyncpa [#allocation6], 1
    %s695 = scalar_lea.sflag [#allocation6], 1
    %696 = vsyncpa %s695, 1
    %697 = vsyncpa [#allocation4], 1
    %s698 = scalar_lea.sflag [#allocation4], 1
    %699 = vsyncpa %s698, 1

</llo_original>
